<compile_context>
chip_gen: v5e
topology: v5e:2x2
jax: 0.10.0
libtpu: 0.0.40
codegen_flags: <defaults>
</compile_context>

<pallas_src>
import jax
import jax.numpy as jnp
from jax.experimental import pallas as pl
from jax.experimental.pallas import tpu as pltpu

# ---------------- config (stand-ins for cfg.*) ----------------
RNN_SIZE = 32          # rnn_sizes[0]
RNN_LEN = 1            # rnn_lens[0]
MLP_SIZES = (64, 32)   # API_MLP_SIZES
NUM_QUANTILES = 8      # QUANTILES_NUMBER
LN_EPS = 1e-5

LANES = max(128, 4 * RNN_SIZE)   # common lane width of the packed slabs (=128 here)


def _round_up(x, m):
    return ((x + m - 1) // m) * m


def _slab_layout(dim_obs, dim_act):
    """Row count / row offset of each weight block inside the packed weight slab."""
    rows = {
        "w1": _round_up(dim_obs, 8),     # (dim_obs, s0), lanes padded to LANES
        "w2": LANES,                     # (s0, s1), rows+lanes zero padded to LANES
        "wgm": LANES,                    # (s1, 4H) with mlp-LN scale folded in, rows padded
        "wa": _round_up(dim_act, 8),     # (dim_act, 4H)
        "whh": _round_up(RNN_SIZE, 8),   # (H, 4H)
        "wo": _round_up(RNN_SIZE, 8),    # (H, num_quantiles), lanes padded
    }
    offs, o = {}, 0
    for name in ("w1", "w2", "wgm", "wa", "whh", "wo"):
        offs[name] = o
        o += rows[name]
    return offs, rows, o


def pack_inputs(obs_cat, act, params):
    """Fold LayerNorm affines / LSTM biases into weights and pack into 4 arrays.

    In a real setup the two slabs only need to be rebuilt when the parameters
    change, not every forward call.
    """
    dim_obs = obs_cat.shape[-1]
    dim_act = act.shape[-1]
    offs, rows, _ = _slab_layout(dim_obs, dim_act)

    def lane_pad(w):
        return jnp.pad(w, ((0, 0), (0, LANES - w.shape[1])))

    def row_pad(w, r):
        return jnp.pad(w, ((0, r - w.shape[0]), (0, 0)))

    # Exact folds:  (LN_raw(x)*g + b) @ W + bias == LN_raw(x) @ (g[:,None]*W) + (b@W + bias)
    w1f = params["g_api"].reshape(-1, 1) * params["w1"]                          # (dim_obs, s0)
    b1f = params["b_api"] @ params["w1"] + params["b1"]                          # (1, s0)
    wgm = params["g_mlp"].reshape(-1, 1) * params["wih_mlp"]                     # (s1, 4H)
    bg = params["b_mlp"] @ params["wih_mlp"] + params["bih"] + params["bhh"]     # (1, 4H)

    w_slab = jnp.concatenate([
        row_pad(lane_pad(w1f), rows["w1"]),
        row_pad(lane_pad(params["w2"]), rows["w2"]),
        row_pad(lane_pad(wgm), rows["wgm"]),
        row_pad(lane_pad(params["wih_act"]), rows["wa"]),
        row_pad(lane_pad(params["whh"]), rows["whh"]),
        row_pad(lane_pad(params["wout"]), rows["wo"]),
    ], axis=0).astype(jnp.float32)                                               # (352, 128)

    b_slab = jnp.concatenate([
        lane_pad(b1f),                   # row 0: first Linear bias (LN bias folded in)
        lane_pad(params["b2"]),          # row 1: second Linear bias
        lane_pad(bg),                    # row 2: LSTM gate bias (b_mlp@W_ih + bih + bhh)
        lane_pad(params["bout"]),        # row 3: output head bias
        jnp.zeros((4, LANES), jnp.float32),
    ], axis=0).astype(jnp.float32)                                               # (8, 128)

    act_p = jnp.pad(act.astype(jnp.float32), ((0, 0), (0, rows["wa"] - dim_act)))
    return obs_cat.astype(jnp.float32), act_p, w_slab, b_slab, offs, rows


def _make_kernel(batch, dim_obs, offs, rows):
    H = RNN_SIZE
    NQ = NUM_QUANTILES
    s1 = MLP_SIZES[1]

    def kernel(obs_ref, act_ref, w_ref, b_ref, out_ref, hs_ref):
        # ---- LayerNorm(obs); its affine is folded into the first Linear ----
        x = obs_ref[...]
        mu = jnp.mean(x, axis=-1, keepdims=True)
        var = jnp.mean(jnp.square(x - mu), axis=-1, keepdims=True)
        xn = (x - mu) * jax.lax.rsqrt(var + LN_EPS)

        # ---- mlp_api: Linear+ReLU, Linear+ReLU (full 128-lane width; padding
        #      lanes are exactly zero). The extra self.activation() in
        #      forward() is an idempotent ReLU and is omitted. ----
        h1 = jnp.maximum(
            jnp.dot(xn, w_ref[offs["w1"]:offs["w1"] + dim_obs, :],
                    preferred_element_type=jnp.float32) + b_ref[0:1, :], 0.0)
        h2 = jnp.maximum(
            jnp.dot(h1, w_ref[offs["w2"]:offs["w2"] + rows["w2"], :],
                    preferred_element_type=jnp.float32) + b_ref[1:2, :], 0.0)

        # ---- LayerNorm(mlp_out) over the s1 real lanes. Padding lanes are
        #      zero so full-width sums are exact; the affine is folded into the
        #      LSTM input weights, whose padding rows are zero, so the garbage
        #      produced in lanes >= s1 never contributes. ----
        inv_n = 1.0 / float(s1)
        m2 = jnp.sum(h2, axis=-1, keepdims=True) * inv_n
        v2 = jnp.maximum(
            jnp.sum(h2 * h2, axis=-1, keepdims=True) * inv_n - m2 * m2, 0.0)
        h2n = (h2 - m2) * jax.lax.rsqrt(v2 + LN_EPS)

        # ---- LSTM input projection for every "timestep" (= batch row) ----
        gx = (jnp.dot(h2n, w_ref[offs["wgm"]:offs["wgm"] + rows["wgm"], :],
                      preferred_element_type=jnp.float32)
              + jnp.dot(act_ref[...], w_ref[offs["wa"]:offs["wa"] + rows["wa"], :],
                        preferred_element_type=jnp.float32)
              + b_ref[2:3, :])                                    # (B, 4H)

        # ---- fully unrolled LSTM recurrence; h/c stay in vregs ----
        whh = w_ref[offs["whh"]:offs["whh"] + H, :]               # (H, 4H), live across loop
        h = jnp.zeros((1, H), jnp.float32)
        c = jnp.zeros((1, H), jnp.float32)
        for t in range(batch):                                    # B is small and static
            gates = gx[t:t + 1, :]
            if t > 0:                                             # h0 = 0 -> no matmul at t = 0
                gates = gates + jnp.dot(h, whh, preferred_element_type=jnp.float32)
            sg = jax.nn.sigmoid(gates)                            # one EUP pass for i, f, o
            th = jnp.tanh(gates)                                  # one EUP pass for g
            i = sg[:, 0:H]
            g = th[:, 2 * H:3 * H]
            o = sg[:, 3 * H:4 * H]
            if t > 0:                                             # c0 = 0
                c = sg[:, H:2 * H] * c + i * g
            else:
                c = i * g
            h = o * jnp.tanh(c)
            hs_ref[t:t + 1, :] = h                                # store is off the serial chain

        # ---- output head hoisted out of the recurrence: one matmul + one store ----
        res = (jnp.dot(hs_ref[...], w_ref[offs["wo"]:offs["wo"] + H, :],
                       preferred_element_type=jnp.float32) + b_ref[3:4, :])
        out_ref[...] = res[:, 0:NQ]         # torch.squeeze(-1) is a no-op (NQ > 1)

    return kernel


def qrcnn_forward_pallas(obs_cat, act, params):
    B = obs_cat.shape[0]
    dim_obs = obs_cat.shape[-1]
    obs_f, act_p, w_slab, b_slab, offs, rows = pack_inputs(obs_cat, act, params)
    kernel = _make_kernel(B, dim_obs, offs, rows)
    out = pl.pallas_call(
        kernel,
        out_shape=jax.ShapeDtypeStruct((B, NUM_QUANTILES), jnp.float32),
        in_specs=[pl.BlockSpec(memory_space=pltpu.MemorySpace.VMEM)] * 4,
        out_specs=pl.BlockSpec(memory_space=pltpu.MemorySpace.VMEM),
        scratch_shapes=[pltpu.VMEM((B, RNN_SIZE), jnp.float32)],   # h_t rows for hoisted head
    )(obs_f, act_p, w_slab, b_slab)
    return out


# ---------------- pure-JAX reference (faithful to the PyTorch module) ----------------
def qrcnn_forward_ref(obs_cat, act, params):
    H = RNN_SIZE
    x = obs_cat
    mean = jnp.mean(x, -1, keepdims=True)
    var = jnp.mean(jnp.square(x - mean), -1, keepdims=True)
    xn = (x - mean) * jax.lax.rsqrt(var + LN_EPS) * params["g_api"] + params["b_api"]
    h1 = jnp.maximum(xn @ params["w1"] + params["b1"], 0.0)
    h2 = jnp.maximum(h1 @ params["w2"] + params["b2"], 0.0)
    h2 = jnp.maximum(h2, 0.0)
    m2 = jnp.mean(h2, -1, keepdims=True)
    v2 = jnp.mean(jnp.square(h2 - m2), -1, keepdims=True)
    h2n = (h2 - m2) * jax.lax.rsqrt(v2 + LN_EPS) * params["g_mlp"] + params["b_mlp"]
    gx_all = (h2n @ params["wih_mlp"] + act @ params["wih_act"]
              + params["bih"] + params["bhh"])                      # (B, 4H)

    def lstm_step(carry, gx):
        h, c = carry
        gates = gx + (h @ params["whh"])[0]
        i = jax.nn.sigmoid(gates[0:H])
        f = jax.nn.sigmoid(gates[H:2 * H])
        g = jnp.tanh(gates[2 * H:3 * H])
        o = jax.nn.sigmoid(gates[3 * H:4 * H])
        c_new = f * c[0] + i * g
        h_new = o * jnp.tanh(c_new)
        return (h_new[None, :], c_new[None, :]), h_new

    init = (jnp.zeros((1, H), jnp.float32), jnp.zeros((1, H), jnp.float32))
    _, hs = jax.lax.scan(lstm_step, init, gx_all)
    return hs @ params["wout"] + params["bout"]


def init_params(key, dim_obs, dim_act):
    H = RNN_SIZE
    s0, s1 = MLP_SIZES
    ks = jax.random.split(key, 12)

    def u(k, shape, fan_in):
        bound = 1.0 / jnp.sqrt(fan_in)
        return jax.random.uniform(k, shape, jnp.float32, -bound, bound)

    return {
        "g_api": jnp.ones((1, dim_obs), jnp.float32),
        "b_api": jnp.zeros((1, dim_obs), jnp.float32),
        "w1": u(ks[0], (dim_obs, s0), dim_obs),
        "b1": u(ks[1], (1, s0), dim_obs),
        "w2": u(ks[2], (s0, s1), s0),
        "b2": u(ks[3], (1, s1), s0),
        "g_mlp": jnp.ones((1, s1), jnp.float32),
        "b_mlp": jnp.zeros((1, s1), jnp.float32),
        "wih_mlp": u(ks[4], (s1, 4 * H), H),
        "wih_act": u(ks[5], (dim_act, 4 * H), H),
        "whh": u(ks[6], (H, 4 * H), H),
        "bih": u(ks[7], (1, 4 * H), H),
        "bhh": u(ks[8], (1, 4 * H), H),
        "wout": u(ks[9], (H, NUM_QUANTILES), H),
        "bout": u(ks[10], (1, NUM_QUANTILES), H),
    }


if __name__ == "__main__":
    key = jax.random.PRNGKey(0)
    k_obs0, k_obs1, k_act, k_par = jax.random.split(key, 4)

    B = 8                                   # batch (== LSTM sequence length here)
    obs0 = jax.random.normal(k_obs0, (B, 4, 4), jnp.float32)   # observation[0]
    obs1 = jax.random.normal(k_obs1, (B, 8), jnp.float32)      # observation[1]
    act = jax.random.normal(k_act, (B, 2), jnp.float32)        # action

    # glue: flatten each observation to (B, -1) and concat (as in forward())
    obs_cat = jnp.concatenate(
        [obs0.reshape(B, -1), obs1.reshape(B, -1)], axis=-1).astype(jnp.float32)
    dim_obs = obs_cat.shape[-1]             # 16 + 8 = 24
    dim_act = act.shape[-1]

    params = init_params(k_par, dim_obs, dim_act)

    forward = jax.jit(qrcnn_forward_pallas)
    out = jax.block_until_ready(forward(obs_cat, act, params))

    ref = jax.block_until_ready(qrcnn_forward_ref(obs_cat, act, params))
    assert out.shape == (B, NUM_QUANTILES)
    assert jnp.allclose(out, ref, atol=1e-4, rtol=1e-4), (
        f"mismatch: max abs err {jnp.max(jnp.abs(out - ref))}")

    print("KERNEL_OK")
</pallas_src>

<mosaic_0001>
module attributes {stable_mosaic.version = 11 : i64} {
  func.func @kernel(%arg0: memref<8x24xf32, #tpu.memory_space<vmem>>, %arg1: memref<8x8xf32, #tpu.memory_space<vmem>>, %arg2: memref<352x128xf32, #tpu.memory_space<vmem>>, %arg3: memref<8x128xf32, #tpu.memory_space<vmem>>, %arg4: memref<8x8xf32, #tpu.memory_space<vmem>>, %arg5: memref<8x32xf32, #tpu.memory_space<vmem>>) attributes {dimension_semantics = [], scalar_prefetch = 0 : i64, scratch_operands = 1 : i64, tpu.core_type = #tpu.core_type<tc>} {
    %c0 = arith.constant 0 : index
    %c0_0 = arith.constant 0 : index
    %0 = vector.load %arg0[%c0, %c0_0] : memref<8x24xf32, #tpu.memory_space<vmem>>, vector<8x24xf32>
    %cst = arith.constant dense<0.000000e+00> : vector<8xf32>
    %1 = vector.multi_reduction <add>, %0, %cst [1] : vector<8x24xf32> to vector<8xf32>
    %2 = vector.shape_cast %1 : vector<8xf32> to vector<8x1xf32>
    %cst_1 = arith.constant 2.400000e+01 : f32
    %3 = vector.broadcast %cst_1 : f32 to vector<8x1xf32>
    %4 = arith.divf %2, %3 : vector<8x1xf32>
    %5 = vector.broadcast %4 : vector<8x1xf32> to vector<8x24xf32>
    %6 = arith.subf %0, %5 : vector<8x24xf32>
    %7 = arith.mulf %6, %6 : vector<8x24xf32>
    %cst_2 = arith.constant dense<0.000000e+00> : vector<8xf32>
    %8 = vector.multi_reduction <add>, %7, %cst_2 [1] : vector<8x24xf32> to vector<8xf32>
    %9 = vector.shape_cast %8 : vector<8xf32> to vector<8x1xf32>
    %cst_3 = arith.constant 2.400000e+01 : f32
    %10 = vector.broadcast %cst_3 : f32 to vector<8x1xf32>
    %11 = arith.divf %9, %10 : vector<8x1xf32>
    %12 = vector.broadcast %4 : vector<8x1xf32> to vector<8x24xf32>
    %13 = arith.subf %0, %12 : vector<8x24xf32>
    %cst_4 = arith.constant 9.99999974E-6 : f32
    %14 = vector.broadcast %cst_4 : f32 to vector<8x1xf32>
    %15 = arith.addf %11, %14 : vector<8x1xf32>
    %16 = math.rsqrt %15 : vector<8x1xf32>
    %17 = vector.broadcast %16 : vector<8x1xf32> to vector<8x24xf32>
    %18 = arith.mulf %13, %17 : vector<8x24xf32>
    %c0_5 = arith.constant 0 : index
    %c0_6 = arith.constant 0 : index
    %19 = vector.load %arg2[%c0_5, %c0_6] : memref<352x128xf32, #tpu.memory_space<vmem>>, vector<24x128xf32>
    %cst_7 = arith.constant dense<0.000000e+00> : vector<8x128xf32>
    %20 = tpu.matmul %18, %19, %cst_7 {dimension_numbers = #tpu.dot_dimension_numbers<[1], [0], [0], [1], [0, 0, 1, 1], [], []>} : vector<8x24xf32>, vector<24x128xf32>, vector<8x128xf32> -> vector<8x128xf32>
    %c0_8 = arith.constant 0 : index
    %c0_9 = arith.constant 0 : index
    %21 = vector.load %arg3[%c0_8, %c0_9] : memref<8x128xf32, #tpu.memory_space<vmem>>, vector<1x128xf32>
    %22 = vector.broadcast %21 : vector<1x128xf32> to vector<8x128xf32>
    %23 = arith.addf %20, %22 : vector<8x128xf32>
    %cst_10 = arith.constant 0.000000e+00 : f32
    %24 = vector.broadcast %cst_10 : f32 to vector<8x128xf32>
    %25 = arith.maximumf %23, %24 : vector<8x128xf32>
    %c24 = arith.constant 24 : index
    %c0_11 = arith.constant 0 : index
    %26 = vector.load %arg2[%c24, %c0_11] : memref<352x128xf32, #tpu.memory_space<vmem>>, vector<128x128xf32>
    %cst_12 = arith.constant dense<0.000000e+00> : vector<8x128xf32>
    %27 = tpu.matmul %25, %26, %cst_12 {dimension_numbers = #tpu.dot_dimension_numbers<[1], [0], [0], [1], [0, 0, 1, 1], [], []>} : vector<8x128xf32>, vector<128x128xf32>, vector<8x128xf32> -> vector<8x128xf32>
    %c1 = arith.constant 1 : index
    %c0_13 = arith.constant 0 : index
    %28 = vector.load %arg3[%c1, %c0_13] : memref<8x128xf32, #tpu.memory_space<vmem>>, vector<1x128xf32>
    %29 = vector.broadcast %28 : vector<1x128xf32> to vector<8x128xf32>
    %30 = arith.addf %27, %29 : vector<8x128xf32>
    %cst_14 = arith.constant 0.000000e+00 : f32
    %31 = vector.broadcast %cst_14 : f32 to vector<8x128xf32>
    %32 = arith.maximumf %30, %31 : vector<8x128xf32>
    %cst_15 = arith.constant dense<0.000000e+00> : vector<8xf32>
    %33 = vector.multi_reduction <add>, %32, %cst_15 [1] : vector<8x128xf32> to vector<8xf32>
    %34 = vector.shape_cast %33 : vector<8xf32> to vector<8x1xf32>
    %cst_16 = arith.constant 3.125000e-02 : f32
    %35 = vector.broadcast %cst_16 : f32 to vector<8x1xf32>
    %36 = arith.mulf %34, %35 : vector<8x1xf32>
    %37 = arith.mulf %32, %32 : vector<8x128xf32>
    %cst_17 = arith.constant dense<0.000000e+00> : vector<8xf32>
    %38 = vector.multi_reduction <add>, %37, %cst_17 [1] : vector<8x128xf32> to vector<8xf32>
    %39 = vector.shape_cast %38 : vector<8xf32> to vector<8x1xf32>
    %cst_18 = arith.constant 3.125000e-02 : f32
    %40 = vector.broadcast %cst_18 : f32 to vector<8x1xf32>
    %41 = arith.mulf %39, %40 : vector<8x1xf32>
    %42 = arith.mulf %36, %36 : vector<8x1xf32>
    %43 = arith.subf %41, %42 : vector<8x1xf32>
    %cst_19 = arith.constant 0.000000e+00 : f32
    %44 = vector.broadcast %cst_19 : f32 to vector<8x1xf32>
    %45 = arith.maximumf %43, %44 : vector<8x1xf32>
    %46 = vector.broadcast %36 : vector<8x1xf32> to vector<8x128xf32>
    %47 = arith.subf %32, %46 : vector<8x128xf32>
    %cst_20 = arith.constant 9.99999974E-6 : f32
    %48 = vector.broadcast %cst_20 : f32 to vector<8x1xf32>
    %49 = arith.addf %45, %48 : vector<8x1xf32>
    %50 = math.rsqrt %49 : vector<8x1xf32>
    %51 = vector.broadcast %50 : vector<8x1xf32> to vector<8x128xf32>
    %52 = arith.mulf %47, %51 : vector<8x128xf32>
    %c152 = arith.constant 152 : index
    %c0_21 = arith.constant 0 : index
    %53 = vector.load %arg2[%c152, %c0_21] : memref<352x128xf32, #tpu.memory_space<vmem>>, vector<128x128xf32>
    %cst_22 = arith.constant dense<0.000000e+00> : vector<8x128xf32>
    %54 = tpu.matmul %52, %53, %cst_22 {dimension_numbers = #tpu.dot_dimension_numbers<[1], [0], [0], [1], [0, 0, 1, 1], [], []>} : vector<8x128xf32>, vector<128x128xf32>, vector<8x128xf32> -> vector<8x128xf32>
    %c0_23 = arith.constant 0 : index
    %c0_24 = arith.constant 0 : index
    %55 = vector.load %arg1[%c0_23, %c0_24] : memref<8x8xf32, #tpu.memory_space<vmem>>, vector<8x8xf32>
    %c280 = arith.constant 280 : index
    %c0_25 = arith.constant 0 : index
    %56 = vector.load %arg2[%c280, %c0_25] : memref<352x128xf32, #tpu.memory_space<vmem>>, vector<8x128xf32>
    %cst_26 = arith.constant dense<0.000000e+00> : vector<8x128xf32>
    %57 = tpu.matmul %55, %56, %cst_26 {dimension_numbers = #tpu.dot_dimension_numbers<[1], [0], [0], [1], [0, 0, 1, 1], [], []>} : vector<8x8xf32>, vector<8x128xf32>, vector<8x128xf32> -> vector<8x128xf32>
    %58 = arith.addf %54, %57 : vector<8x128xf32>
    %c2 = arith.constant 2 : index
    %c0_27 = arith.constant 0 : index
    %59 = vector.load %arg3[%c2, %c0_27] : memref<8x128xf32, #tpu.memory_space<vmem>>, vector<1x128xf32>
    %60 = vector.broadcast %59 : vector<1x128xf32> to vector<8x128xf32>
    %61 = arith.addf %58, %60 : vector<8x128xf32>
    %c288 = arith.constant 288 : index
    %c0_28 = arith.constant 0 : index
    %62 = vector.load %arg2[%c288, %c0_28] : memref<352x128xf32, #tpu.memory_space<vmem>>, vector<32x128xf32>
    %63 = vector.extract_strided_slice %61 {offsets = [0, 0], sizes = [1, 128], strides = [1, 1]} : vector<8x128xf32> to vector<1x128xf32>
    %64 = arith.negf %63 : vector<1x128xf32>
    %65 = math.exp %64 : vector<1x128xf32>
    %cst_29 = arith.constant 1.000000e+00 : f32
    %66 = vector.broadcast %cst_29 : f32 to vector<1x128xf32>
    %67 = arith.addf %66, %65 : vector<1x128xf32>
    %68 = arith.divf %66, %67 : vector<1x128xf32>
    %69 = math.tanh %63 : vector<1x128xf32>
    %70 = vector.extract_strided_slice %68 {offsets = [0, 0], sizes = [1, 32], strides = [1, 1]} : vector<1x128xf32> to vector<1x32xf32>
    %71 = vector.extract_strided_slice %69 {offsets = [0, 64], sizes = [1, 32], strides = [1, 1]} : vector<1x128xf32> to vector<1x32xf32>
    %72 = vector.extract_strided_slice %68 {offsets = [0, 96], sizes = [1, 32], strides = [1, 1]} : vector<1x128xf32> to vector<1x32xf32>
    %73 = arith.mulf %70, %71 : vector<1x32xf32>
    %74 = math.tanh %73 : vector<1x32xf32>
    %75 = arith.mulf %72, %74 : vector<1x32xf32>
    %c0_30 = arith.constant 0 : index
    %c0_31 = arith.constant 0 : index
    %76 = vector.load %arg5[%c0_30, %c0_31] : memref<8x32xf32, #tpu.memory_space<vmem>>, vector<1x32xf32>
    tpu.vector_store %arg5[%c0_30, %c0_31], %75 {strides = array<i32>} : memref<8x32xf32, #tpu.memory_space<vmem>>, vector<1x32xf32>,
    %77 = vector.extract_strided_slice %61 {offsets = [1, 0], sizes = [1, 128], strides = [1, 1]} : vector<8x128xf32> to vector<1x128xf32>
    %cst_32 = arith.constant dense<0.000000e+00> : vector<1x128xf32>
    %78 = tpu.matmul %75, %62, %cst_32 {dimension_numbers = #tpu.dot_dimension_numbers<[1], [0], [0], [1], [0, 0, 1, 1], [], []>} : vector<1x32xf32>, vector<32x128xf32>, vector<1x128xf32> -> vector<1x128xf32>
    %79 = arith.addf %77, %78 : vector<1x128xf32>
    %80 = arith.negf %79 : vector<1x128xf32>
    %81 = math.exp %80 : vector<1x128xf32>
    %cst_33 = arith.constant 1.000000e+00 : f32
    %82 = vector.broadcast %cst_33 : f32 to vector<1x128xf32>
    %83 = arith.addf %82, %81 : vector<1x128xf32>
    %84 = arith.divf %82, %83 : vector<1x128xf32>
    %85 = math.tanh %79 : vector<1x128xf32>
    %86 = vector.extract_strided_slice %84 {offsets = [0, 0], sizes = [1, 32], strides = [1, 1]} : vector<1x128xf32> to vector<1x32xf32>
    %87 = vector.extract_strided_slice %85 {offsets = [0, 64], sizes = [1, 32], strides = [1, 1]} : vector<1x128xf32> to vector<1x32xf32>
    %88 = vector.extract_strided_slice %84 {offsets = [0, 96], sizes = [1, 32], strides = [1, 1]} : vector<1x128xf32> to vector<1x32xf32>
    %89 = vector.extract_strided_slice %84 {offsets = [0, 32], sizes = [1, 32], strides = [1, 1]} : vector<1x128xf32> to vector<1x32xf32>
    %90 = arith.mulf %89, %73 : vector<1x32xf32>
    %91 = arith.mulf %86, %87 : vector<1x32xf32>
    %92 = arith.addf %90, %91 : vector<1x32xf32>
    %93 = math.tanh %92 : vector<1x32xf32>
    %94 = arith.mulf %88, %93 : vector<1x32xf32>
    %c1_34 = arith.constant 1 : index
    %c0_35 = arith.constant 0 : index
    %95 = vector.load %arg5[%c1_34, %c0_35] : memref<8x32xf32, #tpu.memory_space<vmem>>, vector<1x32xf32>
    tpu.vector_store %arg5[%c1_34, %c0_35], %94 {strides = array<i32>} : memref<8x32xf32, #tpu.memory_space<vmem>>, vector<1x32xf32>,
    %96 = vector.extract_strided_slice %61 {offsets = [2, 0], sizes = [1, 128], strides = [1, 1]} : vector<8x128xf32> to vector<1x128xf32>
    %cst_36 = arith.constant dense<0.000000e+00> : vector<1x128xf32>
    %97 = tpu.matmul %94, %62, %cst_36 {dimension_numbers = #tpu.dot_dimension_numbers<[1], [0], [0], [1], [0, 0, 1, 1], [], []>} : vector<1x32xf32>, vector<32x128xf32>, vector<1x128xf32> -> vector<1x128xf32>
    %98 = arith.addf %96, %97 : vector<1x128xf32>
    %99 = arith.negf %98 : vector<1x128xf32>
    %100 = math.exp %99 : vector<1x128xf32>
    %cst_37 = arith.constant 1.000000e+00 : f32
    %101 = vector.broadcast %cst_37 : f32 to vector<1x128xf32>
    %102 = arith.addf %101, %100 : vector<1x128xf32>
    %103 = arith.divf %101, %102 : vector<1x128xf32>
    %104 = math.tanh %98 : vector<1x128xf32>
    %105 = vector.extract_strided_slice %103 {offsets = [0, 0], sizes = [1, 32], strides = [1, 1]} : vector<1x128xf32> to vector<1x32xf32>
    %106 = vector.extract_strided_slice %104 {offsets = [0, 64], sizes = [1, 32], strides = [1, 1]} : vector<1x128xf32> to vector<1x32xf32>
    %107 = vector.extract_strided_slice %103 {offsets = [0, 96], sizes = [1, 32], strides = [1, 1]} : vector<1x128xf32> to vector<1x32xf32>
    %108 = vector.extract_strided_slice %103 {offsets = [0, 32], sizes = [1, 32], strides = [1, 1]} : vector<1x128xf32> to vector<1x32xf32>
    %109 = arith.mulf %108, %92 : vector<1x32xf32>
    %110 = arith.mulf %105, %106 : vector<1x32xf32>
    %111 = arith.addf %109, %110 : vector<1x32xf32>
    %112 = math.tanh %111 : vector<1x32xf32>
    %113 = arith.mulf %107, %112 : vector<1x32xf32>
    %c2_38 = arith.constant 2 : index
    %c0_39 = arith.constant 0 : index
    %114 = vector.load %arg5[%c2_38, %c0_39] : memref<8x32xf32, #tpu.memory_space<vmem>>, vector<1x32xf32>
    tpu.vector_store %arg5[%c2_38, %c0_39], %113 {strides = array<i32>} : memref<8x32xf32, #tpu.memory_space<vmem>>, vector<1x32xf32>,
    %115 = vector.extract_strided_slice %61 {offsets = [3, 0], sizes = [1, 128], strides = [1, 1]} : vector<8x128xf32> to vector<1x128xf32>
    %cst_40 = arith.constant dense<0.000000e+00> : vector<1x128xf32>
    %116 = tpu.matmul %113, %62, %cst_40 {dimension_numbers = #tpu.dot_dimension_numbers<[1], [0], [0], [1], [0, 0, 1, 1], [], []>} : vector<1x32xf32>, vector<32x128xf32>, vector<1x128xf32> -> vector<1x128xf32>
    %117 = arith.addf %115, %116 : vector<1x128xf32>
    %118 = arith.negf %117 : vector<1x128xf32>
    %119 = math.exp %118 : vector<1x128xf32>
    %cst_41 = arith.constant 1.000000e+00 : f32
    %120 = vector.broadcast %cst_41 : f32 to vector<1x128xf32>
    %121 = arith.addf %120, %119 : vector<1x128xf32>
    %122 = arith.divf %120, %121 : vector<1x128xf32>
    %123 = math.tanh %117 : vector<1x128xf32>
    %124 = vector.extract_strided_slice %122 {offsets = [0, 0], sizes = [1, 32], strides = [1, 1]} : vector<1x128xf32> to vector<1x32xf32>
    %125 = vector.extract_strided_slice %123 {offsets = [0, 64], sizes = [1, 32], strides = [1, 1]} : vector<1x128xf32> to vector<1x32xf32>
    %126 = vector.extract_strided_slice %122 {offsets = [0, 96], sizes = [1, 32], strides = [1, 1]} : vector<1x128xf32> to vector<1x32xf32>
    %127 = vector.extract_strided_slice %122 {offsets = [0, 32], sizes = [1, 32], strides = [1, 1]} : vector<1x128xf32> to vector<1x32xf32>
    %128 = arith.mulf %127, %111 : vector<1x32xf32>
    %129 = arith.mulf %124, %125 : vector<1x32xf32>
    %130 = arith.addf %128, %129 : vector<1x32xf32>
    %131 = math.tanh %130 : vector<1x32xf32>
    %132 = arith.mulf %126, %131 : vector<1x32xf32>
    %c3 = arith.constant 3 : index
    %c0_42 = arith.constant 0 : index
    %133 = vector.load %arg5[%c3, %c0_42] : memref<8x32xf32, #tpu.memory_space<vmem>>, vector<1x32xf32>
    tpu.vector_store %arg5[%c3, %c0_42], %132 {strides = array<i32>} : memref<8x32xf32, #tpu.memory_space<vmem>>, vector<1x32xf32>,
    %134 = vector.extract_strided_slice %61 {offsets = [4, 0], sizes = [1, 128], strides = [1, 1]} : vector<8x128xf32> to vector<1x128xf32>
    %cst_43 = arith.constant dense<0.000000e+00> : vector<1x128xf32>
    %135 = tpu.matmul %132, %62, %cst_43 {dimension_numbers = #tpu.dot_dimension_numbers<[1], [0], [0], [1], [0, 0, 1, 1], [], []>} : vector<1x32xf32>, vector<32x128xf32>, vector<1x128xf32> -> vector<1x128xf32>
    %136 = arith.addf %134, %135 : vector<1x128xf32>
    %137 = arith.negf %136 : vector<1x128xf32>
    %138 = math.exp %137 : vector<1x128xf32>
    %cst_44 = arith.constant 1.000000e+00 : f32
    %139 = vector.broadcast %cst_44 : f32 to vector<1x128xf32>
    %140 = arith.addf %139, %138 : vector<1x128xf32>
    %141 = arith.divf %139, %140 : vector<1x128xf32>
    %142 = math.tanh %136 : vector<1x128xf32>
    %143 = vector.extract_strided_slice %141 {offsets = [0, 0], sizes = [1, 32], strides = [1, 1]} : vector<1x128xf32> to vector<1x32xf32>
    %144 = vector.extract_strided_slice %142 {offsets = [0, 64], sizes = [1, 32], strides = [1, 1]} : vector<1x128xf32> to vector<1x32xf32>
    %145 = vector.extract_strided_slice %141 {offsets = [0, 96], sizes = [1, 32], strides = [1, 1]} : vector<1x128xf32> to vector<1x32xf32>
    %146 = vector.extract_strided_slice %141 {offsets = [0, 32], sizes = [1, 32], strides = [1, 1]} : vector<1x128xf32> to vector<1x32xf32>
    %147 = arith.mulf %146, %130 : vector<1x32xf32>
    %148 = arith.mulf %143, %144 : vector<1x32xf32>
    %149 = arith.addf %147, %148 : vector<1x32xf32>
    %150 = math.tanh %149 : vector<1x32xf32>
    %151 = arith.mulf %145, %150 : vector<1x32xf32>
    %c4 = arith.constant 4 : index
    %c0_45 = arith.constant 0 : index
    %152 = vector.load %arg5[%c4, %c0_45] : memref<8x32xf32, #tpu.memory_space<vmem>>, vector<1x32xf32>
    tpu.vector_store %arg5[%c4, %c0_45], %151 {strides = array<i32>} : memref<8x32xf32, #tpu.memory_space<vmem>>, vector<1x32xf32>,
    %153 = vector.extract_strided_slice %61 {offsets = [5, 0], sizes = [1, 128], strides = [1, 1]} : vector<8x128xf32> to vector<1x128xf32>
    %cst_46 = arith.constant dense<0.000000e+00> : vector<1x128xf32>
    %154 = tpu.matmul %151, %62, %cst_46 {dimension_numbers = #tpu.dot_dimension_numbers<[1], [0], [0], [1], [0, 0, 1, 1], [], []>} : vector<1x32xf32>, vector<32x128xf32>, vector<1x128xf32> -> vector<1x128xf32>
    %155 = arith.addf %153, %154 : vector<1x128xf32>
    %156 = arith.negf %155 : vector<1x128xf32>
    %157 = math.exp %156 : vector<1x128xf32>
    %cst_47 = arith.constant 1.000000e+00 : f32
    %158 = vector.broadcast %cst_47 : f32 to vector<1x128xf32>
    %159 = arith.addf %158, %157 : vector<1x128xf32>
    %160 = arith.divf %158, %159 : vector<1x128xf32>
    %161 = math.tanh %155 : vector<1x128xf32>
    %162 = vector.extract_strided_slice %160 {offsets = [0, 0], sizes = [1, 32], strides = [1, 1]} : vector<1x128xf32> to vector<1x32xf32>
    %163 = vector.extract_strided_slice %161 {offsets = [0, 64], sizes = [1, 32], strides = [1, 1]} : vector<1x128xf32> to vector<1x32xf32>
    %164 = vector.extract_strided_slice %160 {offsets = [0, 96], sizes = [1, 32], strides = [1, 1]} : vector<1x128xf32> to vector<1x32xf32>
    %165 = vector.extract_strided_slice %160 {offsets = [0, 32], sizes = [1, 32], strides = [1, 1]} : vector<1x128xf32> to vector<1x32xf32>
    %166 = arith.mulf %165, %149 : vector<1x32xf32>
    %167 = arith.mulf %162, %163 : vector<1x32xf32>
    %168 = arith.addf %166, %167 : vector<1x32xf32>
    %169 = math.tanh %168 : vector<1x32xf32>
    %170 = arith.mulf %164, %169 : vector<1x32xf32>
    %c5 = arith.constant 5 : index
    %c0_48 = arith.constant 0 : index
    %171 = vector.load %arg5[%c5, %c0_48] : memref<8x32xf32, #tpu.memory_space<vmem>>, vector<1x32xf32>
    tpu.vector_store %arg5[%c5, %c0_48], %170 {strides = array<i32>} : memref<8x32xf32, #tpu.memory_space<vmem>>, vector<1x32xf32>,
    %172 = vector.extract_strided_slice %61 {offsets = [6, 0], sizes = [1, 128], strides = [1, 1]} : vector<8x128xf32> to vector<1x128xf32>
    %cst_49 = arith.constant dense<0.000000e+00> : vector<1x128xf32>
    %173 = tpu.matmul %170, %62, %cst_49 {dimension_numbers = #tpu.dot_dimension_numbers<[1], [0], [0], [1], [0, 0, 1, 1], [], []>} : vector<1x32xf32>, vector<32x128xf32>, vector<1x128xf32> -> vector<1x128xf32>
    %174 = arith.addf %172, %173 : vector<1x128xf32>
    %175 = arith.negf %174 : vector<1x128xf32>
    %176 = math.exp %175 : vector<1x128xf32>
    %cst_50 = arith.constant 1.000000e+00 : f32
    %177 = vector.broadcast %cst_50 : f32 to vector<1x128xf32>
    %178 = arith.addf %177, %176 : vector<1x128xf32>
    %179 = arith.divf %177, %178 : vector<1x128xf32>
    %180 = math.tanh %174 : vector<1x128xf32>
    %181 = vector.extract_strided_slice %179 {offsets = [0, 0], sizes = [1, 32], strides = [1, 1]} : vector<1x128xf32> to vector<1x32xf32>
    %182 = vector.extract_strided_slice %180 {offsets = [0, 64], sizes = [1, 32], strides = [1, 1]} : vector<1x128xf32> to vector<1x32xf32>
    %183 = vector.extract_strided_slice %179 {offsets = [0, 96], sizes = [1, 32], strides = [1, 1]} : vector<1x128xf32> to vector<1x32xf32>
    %184 = vector.extract_strided_slice %179 {offsets = [0, 32], sizes = [1, 32], strides = [1, 1]} : vector<1x128xf32> to vector<1x32xf32>
    %185 = arith.mulf %184, %168 : vector<1x32xf32>
    %186 = arith.mulf %181, %182 : vector<1x32xf32>
    %187 = arith.addf %185, %186 : vector<1x32xf32>
    %188 = math.tanh %187 : vector<1x32xf32>
    %189 = arith.mulf %183, %188 : vector<1x32xf32>
    %c6 = arith.constant 6 : index
    %c0_51 = arith.constant 0 : index
    %190 = vector.load %arg5[%c6, %c0_51] : memref<8x32xf32, #tpu.memory_space<vmem>>, vector<1x32xf32>
    tpu.vector_store %arg5[%c6, %c0_51], %189 {strides = array<i32>} : memref<8x32xf32, #tpu.memory_space<vmem>>, vector<1x32xf32>,
    %191 = vector.extract_strided_slice %61 {offsets = [7, 0], sizes = [1, 128], strides = [1, 1]} : vector<8x128xf32> to vector<1x128xf32>
    %cst_52 = arith.constant dense<0.000000e+00> : vector<1x128xf32>
    %192 = tpu.matmul %189, %62, %cst_52 {dimension_numbers = #tpu.dot_dimension_numbers<[1], [0], [0], [1], [0, 0, 1, 1], [], []>} : vector<1x32xf32>, vector<32x128xf32>, vector<1x128xf32> -> vector<1x128xf32>
    %193 = arith.addf %191, %192 : vector<1x128xf32>
    %194 = arith.negf %193 : vector<1x128xf32>
    %195 = math.exp %194 : vector<1x128xf32>
    %cst_53 = arith.constant 1.000000e+00 : f32
    %196 = vector.broadcast %cst_53 : f32 to vector<1x128xf32>
    %197 = arith.addf %196, %195 : vector<1x128xf32>
    %198 = arith.divf %196, %197 : vector<1x128xf32>
    %199 = math.tanh %193 : vector<1x128xf32>
    %200 = vector.extract_strided_slice %198 {offsets = [0, 0], sizes = [1, 32], strides = [1, 1]} : vector<1x128xf32> to vector<1x32xf32>
    %201 = vector.extract_strided_slice %199 {offsets = [0, 64], sizes = [1, 32], strides = [1, 1]} : vector<1x128xf32> to vector<1x32xf32>
    %202 = vector.extract_strided_slice %198 {offsets = [0, 96], sizes = [1, 32], strides = [1, 1]} : vector<1x128xf32> to vector<1x32xf32>
    %203 = vector.extract_strided_slice %198 {offsets = [0, 32], sizes = [1, 32], strides = [1, 1]} : vector<1x128xf32> to vector<1x32xf32>
    %204 = arith.mulf %203, %187 : vector<1x32xf32>
    %205 = arith.mulf %200, %201 : vector<1x32xf32>
    %206 = arith.addf %204, %205 : vector<1x32xf32>
    %207 = math.tanh %206 : vector<1x32xf32>
    %208 = arith.mulf %202, %207 : vector<1x32xf32>
    %c7 = arith.constant 7 : index
    %c0_54 = arith.constant 0 : index
    %209 = vector.load %arg5[%c7, %c0_54] : memref<8x32xf32, #tpu.memory_space<vmem>>, vector<1x32xf32>
    tpu.vector_store %arg5[%c7, %c0_54], %208 {strides = array<i32>} : memref<8x32xf32, #tpu.memory_space<vmem>>, vector<1x32xf32>,
    %c0_55 = arith.constant 0 : index
    %c0_56 = arith.constant 0 : index
    %210 = vector.load %arg5[%c0_55, %c0_56] : memref<8x32xf32, #tpu.memory_space<vmem>>, vector<8x32xf32>
    %c320 = arith.constant 320 : index
    %c0_57 = arith.constant 0 : index
    %211 = vector.load %arg2[%c320, %c0_57] : memref<352x128xf32, #tpu.memory_space<vmem>>, vector<32x128xf32>
    %cst_58 = arith.constant dense<0.000000e+00> : vector<8x128xf32>
    %212 = tpu.matmul %210, %211, %cst_58 {dimension_numbers = #tpu.dot_dimension_numbers<[1], [0], [0], [1], [0, 0, 1, 1], [], []>} : vector<8x32xf32>, vector<32x128xf32>, vector<8x128xf32> -> vector<8x128xf32>
    %c3_59 = arith.constant 3 : index
    %c0_60 = arith.constant 0 : index
    %213 = vector.load %arg3[%c3_59, %c0_60] : memref<8x128xf32, #tpu.memory_space<vmem>>, vector<1x128xf32>
    %214 = vector.broadcast %213 : vector<1x128xf32> to vector<8x128xf32>
    %215 = arith.addf %212, %214 : vector<8x128xf32>
    %216 = vector.extract_strided_slice %215 {offsets = [0, 0], sizes = [8, 8], strides = [1, 1]} : vector<8x128xf32> to vector<8x8xf32>
    %c0_61 = arith.constant 0 : index
    %c0_62 = arith.constant 0 : index
    %217 = vector.load %arg4[%c0_61, %c0_62] : memref<8x8xf32, #tpu.memory_space<vmem>>, vector<8x8xf32>
    tpu.vector_store %arg4[%c0_61, %c0_62], %216 {strides = array<i32>} : memref<8x8xf32, #tpu.memory_space<vmem>>, vector<8x8xf32>,
    return
  }
}

</mosaic_0001>

<llo_original>
// kernel: qrcnn_forward_pallas.1
$region0: #{qrcnn_forward_pallas.1}
  #allocation0 [shape = 'u32[]', space=smem, size = 0x4, offset = 0x4, fixed_abs, tag = 'smem constant byte address 0x4 - core index']
  #allocation1 [shape = 'u32[72,128]{1,0:T(1,128)}', space=vmem, size = 0x9000, scoped, tag = 'internal scratch']
  #allocation2 [shape = 'f32[8,32]{1,0:T(8,128)}', space=vmem, size = 0x1000, scoped, tag = 'scratch operand']
  %s0 = inlined_call_operand.vmem [shape: f32[8,24], index: 0, kind: input, shape index: {}]
  %s1 = inlined_call_operand.vmem [shape: f32[8,8], index: 1, kind: input, shape index: {}]
  %s2 = inlined_call_operand.vmem [shape: f32[352,128], index: 2, kind: input, shape index: {}]
  %s3 = inlined_call_operand.vmem [shape: f32[8,128], index: 3, kind: input, shape index: {}]
  %s4 = inlined_call_operand.hbm [shape: f32[8,8], index: 4, kind: output, shape index: {}]
  %s5 = sld [smem:[#allocation0]]
  $region26: #{qrcnn_forward_pallas.1} parent=0
    _
  %s7 = ssub.s32 1, %s5
  %s8 = scalar_select 0, %s7, %s5
  $region1: #{qrcnn_forward_pallas.1} parent=0
    #allocation3 [shape = 'u8[4096]{0}', space=vmem, size = 0x1000, scoped, tag = 'output window, operand 0, single buffered']
    #allocation4 [shape = 's32[1]{0}', space=sflag, size = 0x4, scoped, tag = 'scoped memory for qrcnn_forward_pallas.1']
    %9 = vsyncpa [#allocation4], 0
    // Predicated region
    $region2: #{qrcnn_forward_pallas.1} parent=1 // pred_check
      _
    $region3: #{qrcnn_forward_pallas.1} parent=1 // pred_check_branch
      %11 = sbr.rel (0) target = $region5
    $region4: #{qrcnn_forward_pallas.1} parent=1 // pred_region
      _
    $region5: #{qrcnn_forward_pallas.1} parent=1 // pred_fallthru
      _
    // Predicated region
    $region6: #{qrcnn_forward_pallas.1} parent=1 // pred_check
      _
    $region7: #{qrcnn_forward_pallas.1} parent=1 // pred_check_branch
      %13 = sbr.rel (0) target = $region9
    $region8: #{qrcnn_forward_pallas.1} parent=1 // pred_region
      _
    $region9: #{qrcnn_forward_pallas.1} parent=1 // pred_fallthru
      _
    // Predicated region
    $region10: #{qrcnn_forward_pallas.1} parent=1 // pred_check
      _
    $region11: #{qrcnn_forward_pallas.1} parent=1 // pred_check_branch
      %15 = sbr.rel (0) target = $region13
    $region12: #{qrcnn_forward_pallas.1} parent=1 // pred_region
      _
    $region13: #{qrcnn_forward_pallas.1} parent=1 // pred_fallthru
      _
    // Predicated region
    $region14: #{qrcnn_forward_pallas.1} parent=1 // pred_check
      _
    $region15: #{qrcnn_forward_pallas.1} parent=1 // pred_check_branch
      %17 = sbr.rel (0) target = $region17
    $region16: #{qrcnn_forward_pallas.1} parent=1 // pred_region
      _
    $region17: #{qrcnn_forward_pallas.1} parent=1 // pred_fallthru
      _
    %v18 = vld [vmem:[%s0] sm:$0xff]
    %vm19 = vcmask 195584
    %v20 = vsel %vm19, %v18, 0.0
    %21 = vadd.xlane.f32.xlu0 %v20
    %v22 = vpop.xlane.xlu0 %21
    %v23 = vrcp.pop 24.0
    %v24 = vmul.f32 24.0, %v23
    %v25 = vsub.f32 1.0, %v24
    %v26 = vmul.f32 %v23, %v25
    %v27 = vadd.f32 %v23, %v26
    %vm28 = vweird.f32 %v23
    %v29 = vsel %vm28, %v23, %v27
    %v30 = vmul.f32 %v22, %v29
    %v31 = vsub.f32 %v18, %v30
    %v32 = vmul.f32 %v31, %v31
    %v33 = vsel %vm19, %v32, 0.0
    %34 = vadd.xlane.f32.xlu0 %v33
    %v35 = vpop.xlane.xlu0 %34
    %v36 = vmul.f32 %v35, %v29
    %v37 = vadd.f32 %v36, 1e-05
    %v38 = vrsqrt.pop %v37
    %v39 = vmul.f32 %v38, %v37
    %v40 = vmul.f32 %v39, %v38
    %v41 = vmul.f32 0.5, %v40
    %v42 = vsub.f32 1.5, %v41
    %v43 = vmul.f32 %v38, %v42
    %vm44 = vweird.f32 %v37
    %vm45 = vweird.f32 %v38
    %vm46 = vmor %vm44, %vm45
    %v47 = vsel %vm46, %v38, %v43
    %v48 = vmul.f32 %v31, %v47
    %v49 = vld [vmem:[%s2] sm:$0xff]
    %v50 = vld [vmem:[%s2 + $0x8] sm:$0xff]
    %v51 = vld [vmem:[%s2 + $0x10] sm:$0xff]
    %v52 = vld [vmem:[%s3] sm:$0x1]
    %v53 = vperm.slane %v52, 0
    %v55 = vsel %vm19, %v48, 0
    %57 = vmatpush.msra.mxu0 0.0
    %58 = vmatpush.msra.mxu0 0.0
    %59 = vmatpush.msra.mxu0 0.0
    %60 = vmatpush.msra.mxu0 0.0
    %61 = vmatpush.msra.mxu0 0.0
    %62 = vmatpush.msra.mxu0 0.0
    %63 = vmatpush.msra.mxu0 0.0
    %64 = vmatpush.msra.mxu0 0.0
    %65 = vmatpush.msra.mxu0 0.0
    %66 = vmatpush.msra.mxu0 0.0
    %67 = vmatpush.msra.mxu0 0.0
    %68 = vmatpush.msra.mxu0 0.0
    %69 = vmatpush.msra.mxu0 0.0
    %70 = vmatpush.msra.mxu0 %v51
    %71 = vmatpush.msra.mxu0 %v50
    %72 = vmatpush.msra.mxu0 %v49
    %73 = vmatmul.f32.gmra.mxu0 %v55
    %v74 = vpop.f32.mrf.mxu0
    %v75 = vadd.f32 %v53, %v74
    %76 = vdwg.mxu0
    %v77 = vmax.f32 %v75, 0.0
    %v78 = vld [vmem:[%s2 + $0x18] sm:$0xff]
    %v79 = vld [vmem:[%s2 + $0x20] sm:$0xff]
    %v80 = vld [vmem:[%s2 + $0x28] sm:$0xff]
    %v81 = vld [vmem:[%s2 + $0x30] sm:$0xff]
    %v82 = vld [vmem:[%s2 + $0x38] sm:$0xff]
    %v83 = vld [vmem:[%s2 + $0x40] sm:$0xff]
    %v84 = vld [vmem:[%s2 + $0x48] sm:$0xff]
    %v85 = vld [vmem:[%s2 + $0x50] sm:$0xff]
    %v86 = vld [vmem:[%s2 + $0x58] sm:$0xff]
    %v87 = vld [vmem:[%s2 + $0x60] sm:$0xff]
    %v88 = vld [vmem:[%s2 + $0x68] sm:$0xff]
    %v89 = vld [vmem:[%s2 + $0x70] sm:$0xff]
    %v90 = vld [vmem:[%s2 + $0x78] sm:$0xff]
    %v91 = vld [vmem:[%s2 + $0x80] sm:$0xff]
    %v92 = vld [vmem:[%s2 + $0x88] sm:$0xff]
    %v93 = vld [vmem:[%s2 + $0x90] sm:$0xff]
    %v94 = vld [vmem:[%s3 + $0x1] sm:$0x1]
    %v95 = vperm.slane %v94, 0
    %96 = vmatpush.msra.mxu0 %v93
    %97 = vmatpush.msra.mxu0 %v92
    %98 = vmatpush.msra.mxu0 %v91
    %99 = vmatpush.msra.mxu0 %v90
    %100 = vmatpush.msra.mxu0 %v89
    %101 = vmatpush.msra.mxu0 %v88
    %102 = vmatpush.msra.mxu0 %v87
    %103 = vmatpush.msra.mxu0 %v86
    %104 = vmatpush.msra.mxu0 %v85
    %105 = vmatpush.msra.mxu0 %v84
    %106 = vmatpush.msra.mxu0 %v83
    %107 = vmatpush.msra.mxu0 %v82
    %108 = vmatpush.msra.mxu0 %v81
    %109 = vmatpush.msra.mxu0 %v80
    %110 = vmatpush.msra.mxu0 %v79
    %111 = vmatpush.msra.mxu0 %v78
    %112 = vmatmul.f32.gmra.mxu0 %v77
    %v113 = vpop.f32.mrf.mxu0
    %v114 = vadd.f32 %v95, %v113
    %115 = vdwg.mxu0
    %v116 = vmax.f32 %v114, 0.0
    %117 = vadd.xlane.f32.xlu0 %v116
    %v118 = vpop.xlane.xlu0 %117
    %v119 = vmul.f32 %v118, 0.03125
    %v120 = vmul.f32 %v116, %v116
    %121 = vadd.xlane.f32.xlu0 %v120
    %v122 = vpop.xlane.xlu0 %121
    %v123 = vmul.f32 %v122, 0.03125
    %v124 = vmul.f32 %v119, %v119
    %v125 = vsub.f32 %v123, %v124
    %v126 = vmax.f32 %v125, 0.0
    %v127 = vsub.f32 %v116, %v119
    %v128 = vadd.f32 %v126, 1e-05
    %v129 = vrsqrt.pop %v128
    %v130 = vmul.f32 %v129, %v128
    %v131 = vmul.f32 %v130, %v129
    %v132 = vmul.f32 0.5, %v131
    %v133 = vsub.f32 1.5, %v132
    %v134 = vmul.f32 %v129, %v133
    %vm135 = vweird.f32 %v128
    %vm136 = vweird.f32 %v129
    %vm137 = vmor %vm135, %vm136
    %v138 = vsel %vm137, %v129, %v134
    %v139 = vmul.f32 %v127, %v138
    %v140 = vld [vmem:[%s2 + $0x98] sm:$0xff]
    %v141 = vld [vmem:[%s2 + $0xa0] sm:$0xff]
    %v142 = vld [vmem:[%s2 + $0xa8] sm:$0xff]
    %v143 = vld [vmem:[%s2 + $0xb0] sm:$0xff]
    %v144 = vld [vmem:[%s2 + $0xb8] sm:$0xff]
    %v145 = vld [vmem:[%s2 + $0xc0] sm:$0xff]
    %v146 = vld [vmem:[%s2 + $0xc8] sm:$0xff]
    %v147 = vld [vmem:[%s2 + $0xd0] sm:$0xff]
    %v148 = vld [vmem:[%s2 + $0xd8] sm:$0xff]
    %v149 = vld [vmem:[%s2 + $0xe0] sm:$0xff]
    %v150 = vld [vmem:[%s2 + $0xe8] sm:$0xff]
    %v151 = vld [vmem:[%s2 + $0xf0] sm:$0xff]
    %v152 = vld [vmem:[%s2 + $0xf8] sm:$0xff]
    %v153 = vld [vmem:[%s2 + $0x100] sm:$0xff]
    %v154 = vld [vmem:[%s2 + $0x108] sm:$0xff]
    %v155 = vld [vmem:[%s2 + $0x110] sm:$0xff]
    %v156 = vld [vmem:[%s1] sm:$0xff]
    %v157 = vld [vmem:[%s2 + $0x118] sm:$0xff]
    %vm158 = vcmask 64512
    %v160 = vsel %vm158, %v156, 0
    %162 = vmatpush.msra.mxu0 0.0
    %163 = vmatpush.msra.mxu0 0.0
    %164 = vmatpush.msra.mxu0 0.0
    %165 = vmatpush.msra.mxu0 0.0
    %166 = vmatpush.msra.mxu0 0.0
    %167 = vmatpush.msra.mxu0 0.0
    %168 = vmatpush.msra.mxu0 0.0
    %169 = vmatpush.msra.mxu0 0.0
    %170 = vmatpush.msra.mxu0 0.0
    %171 = vmatpush.msra.mxu0 0.0
    %172 = vmatpush.msra.mxu0 0.0
    %173 = vmatpush.msra.mxu0 0.0
    %174 = vmatpush.msra.mxu0 0.0
    %175 = vmatpush.msra.mxu0 0.0
    %176 = vmatpush.msra.mxu0 0.0
    %177 = vmatpush.msra.mxu0 %v157
    %178 = vmatmul.f32.gmra.mxu0 %v160
    %v179 = vpop.f32.mrf.mxu0
    %v180 = vadd.f32 0.0, %v179
    %181 = vdwg.mxu0
    %182 = vmatpush.msra.mxu0 %v155
    %183 = vmatpush.msra.mxu0 %v154
    %184 = vmatpush.msra.mxu0 %v153
    %185 = vmatpush.msra.mxu0 %v152
    %186 = vmatpush.msra.mxu0 %v151
    %187 = vmatpush.msra.mxu0 %v150
    %188 = vmatpush.msra.mxu0 %v149
    %189 = vmatpush.msra.mxu0 %v148
    %190 = vmatpush.msra.mxu0 %v147
    %191 = vmatpush.msra.mxu0 %v146
    %192 = vmatpush.msra.mxu0 %v145
    %193 = vmatpush.msra.mxu0 %v144
    %194 = vmatpush.msra.mxu0 %v143
    %195 = vmatpush.msra.mxu0 %v142
    %196 = vmatpush.msra.mxu0 %v141
    %197 = vmatpush.msra.mxu0 %v140
    %198 = vmatmul.f32.gmra.mxu0 %v139
    %v199 = vpop.f32.mrf.mxu0
    %v200 = vadd.f32 %v180, %v199
    %201 = vdwg.mxu0
    %v202 = vld [vmem:[%s3 + $0x2] sm:$0x1]
    %v203 = vperm.slane %v202, 0
    %v204 = vadd.f32 %v200, %v203
    %v205 = vld [vmem:[%s2 + $0x120] sm:$0xff]
    %v206 = vld [vmem:[%s2 + $0x128] sm:$0xff]
    %v207 = vld [vmem:[%s2 + $0x130] sm:$0xff]
    %v208 = vld [vmem:[%s2 + $0x138] sm:$0xff]
    %v209 = vxor.u32 %v204, 2147483648
    %v210 = vmul.f32 %v209, 1.442695
    %v211 = vpow.pop %v210
    %v212 = vadd.f32 %v211, 1.0
    %v213 = vrcp.pop %v212
    %v214 = vmul.f32 %v212, %v213
    %v215 = vsub.f32 1.0, %v214
    %v216 = vmul.f32 %v213, %v215
    %v217 = vadd.f32 %v213, %v216
    %vm218 = vweird.f32 %v212
    %vm219 = vweird.f32 %v213
    %vm220 = vmor %vm218, %vm219
    %v221 = vsel %vm220, %v213, %v217
    %v222 = vand.u32 2147483647, %v212
    %vm223 = vcmp.eq.f32.partialorder %v222, 8.507059e+37
    %v224 = vand.u32 %v212, 2147483648
    %v225 = vor.u32 1.1754944e-38, %v224
    %v226 = vsel %vm223, %v225, %v221
    %v227 = vmul.f32 1.0, %v226
    %v228 = vtanh.pop %v204
    %230 = vrot.lane.b32.xlu0 %v228, 64
    %v231 = vpop.permute.xlu0 %230
    %v233 = vmul.f32 %v227, %v231
    %v234 = vtanh.pop %v233
    %236 = vrot.lane.b32.xlu0 %v234, 96
    %v237 = vpop.permute.xlu0 %236
    %v239 = vmul.f32 %v227, %v237
    %241 = vrot.lane.b32.xlu0 %v239, 32
    %v242 = vpop.permute.xlu0 %241
    %vm244 = vcmask 253952
    %245 = vst.msk [vmem:[#allocation2] sm:$0x1] %vm244, %v242
    %vm246 = vcmask 261120
    %v247 = vsel %vm246, %v242, 0
    %249 = vmatpush.msra.mxu0 0.0
    %250 = vmatpush.msra.mxu0 0.0
    %251 = vmatpush.msra.mxu0 0.0
    %252 = vmatpush.msra.mxu0 0.0
    %253 = vmatpush.msra.mxu0 0.0
    %254 = vmatpush.msra.mxu0 0.0
    %255 = vmatpush.msra.mxu0 0.0
    %256 = vmatpush.msra.mxu0 0.0
    %257 = vmatpush.msra.mxu0 0.0
    %258 = vmatpush.msra.mxu0 0.0
    %259 = vmatpush.msra.mxu0 0.0
    %260 = vmatpush.msra.mxu0 0.0
    %261 = vmatpush.msra.mxu0 %v208
    %262 = vmatpush.msra.mxu0 %v207
    %263 = vmatpush.msra.mxu0 %v206
    %264 = vmatpush.msra.mxu0 %v205
    %265 = vmatmul.f32.gmra.mxu0 %v247
    %v266 = vpop.f32.mrf.mxu0
    %v267 = vadd.f32 0.0, %v266
    %268 = vdwg.mxu0
    %v270 = vrot.slane %v267, 7
    %v272 = vadd.f32 %v204, %v270
    %v273 = vxor.u32 %v272, 2147483648
    %v274 = vmul.f32 %v273, 1.442695
    %v275 = vpow.pop %v274
    %v276 = vadd.f32 %v275, 1.0
    %v277 = vrcp.pop %v276
    %v278 = vmul.f32 %v276, %v277
    %v279 = vsub.f32 1.0, %v278
    %v280 = vmul.f32 %v277, %v279
    %v281 = vadd.f32 %v277, %v280
    %vm282 = vweird.f32 %v276
    %vm283 = vweird.f32 %v277
    %vm284 = vmor %vm282, %vm283
    %v285 = vsel %vm284, %v277, %v281
    %v286 = vand.u32 2147483647, %v276
    %vm287 = vcmp.eq.f32.partialorder %v286, 8.507059e+37
    %v288 = vand.u32 %v276, 2147483648
    %v289 = vor.u32 1.1754944e-38, %v288
    %v290 = vsel %vm287, %v289, %v285
    %v291 = vmul.f32 1.0, %v290
    %v292 = vtanh.pop %v272
    %v294 = vrot.slane %v233, 7
    %295 = vrot.lane.b32.xlu0 %v294, 32
    %v296 = vpop.permute.xlu0 %295
    %v298 = vmul.f32 %v291, %v296
    %300 = vrot.lane.b32.xlu0 %v292, 64
    %v301 = vpop.permute.xlu0 %300
    %v303 = vmul.f32 %v291, %v301
    %305 = vrot.lane.b32.xlu0 %v303, 32
    %v306 = vpop.permute.xlu0 %305
    %v308 = vadd.f32 %v298, %v306
    %v309 = vtanh.pop %v308
    %311 = vrot.lane.b32.xlu0 %v309, 64
    %v312 = vpop.permute.xlu0 %311
    %v314 = vmul.f32 %v291, %v312
    %316 = vrot.lane.b32.xlu0 %v314, 32
    %v317 = vpop.permute.xlu0 %316
    %vm319 = vcmask 254977
    %320 = vst.msk [vmem:[#allocation2] sm:$0x2] %vm319, %v317
    %v321 = vrot.slane %v314, 1
    %322 = vrot.lane.b32.xlu0 %v321, 32
    %v323 = vpop.permute.xlu0 %322
    %v324 = vsel %vm246, %v323, 0
    %326 = vmatpush.msra.mxu0 0.0
    %327 = vmatpush.msra.mxu0 0.0
    %328 = vmatpush.msra.mxu0 0.0
    %329 = vmatpush.msra.mxu0 0.0
    %330 = vmatpush.msra.mxu0 0.0
    %331 = vmatpush.msra.mxu0 0.0
    %332 = vmatpush.msra.mxu0 0.0
    %333 = vmatpush.msra.mxu0 0.0
    %334 = vmatpush.msra.mxu0 0.0
    %335 = vmatpush.msra.mxu0 0.0
    %336 = vmatpush.msra.mxu0 0.0
    %337 = vmatpush.msra.mxu0 0.0
    %338 = vmatpush.msra.mxu0 %v208
    %339 = vmatpush.msra.mxu0 %v207
    %340 = vmatpush.msra.mxu0 %v206
    %341 = vmatpush.msra.mxu0 %v205
    %342 = vmatmul.f32.gmra.mxu0 %v324
    %v343 = vpop.f32.mrf.mxu0
    %v344 = vadd.f32 0.0, %v343
    %345 = vdwg.mxu0
    %v347 = vrot.slane %v344, 6
    %v349 = vadd.f32 %v204, %v347
    %v350 = vxor.u32 %v349, 2147483648
    %v351 = vmul.f32 %v350, 1.442695
    %v352 = vpow.pop %v351
    %v353 = vadd.f32 %v352, 1.0
    %v354 = vrcp.pop %v353
    %v355 = vmul.f32 %v353, %v354
    %v356 = vsub.f32 1.0, %v355
    %v357 = vmul.f32 %v354, %v356
    %v358 = vadd.f32 %v354, %v357
    %vm359 = vweird.f32 %v353
    %vm360 = vweird.f32 %v354
    %vm361 = vmor %vm359, %vm360
    %v362 = vsel %vm361, %v354, %v358
    %v363 = vand.u32 2147483647, %v353
    %vm364 = vcmp.eq.f32.partialorder %v363, 8.507059e+37
    %v365 = vand.u32 %v353, 2147483648
    %v366 = vor.u32 1.1754944e-38, %v365
    %v367 = vsel %vm364, %v366, %v362
    %v368 = vmul.f32 1.0, %v367
    %v369 = vtanh.pop %v349
    %v371 = vrot.slane %v308, 7
    %v373 = vmul.f32 %v368, %v371
    %375 = vrot.lane.b32.xlu0 %v369, 64
    %v376 = vpop.permute.xlu0 %375
    %v378 = vmul.f32 %v368, %v376
    %380 = vrot.lane.b32.xlu0 %v378, 32
    %v381 = vpop.permute.xlu0 %380
    %v383 = vadd.f32 %v373, %v381
    %v384 = vtanh.pop %v383
    %386 = vrot.lane.b32.xlu0 %v384, 64
    %v387 = vpop.permute.xlu0 %386
    %v389 = vmul.f32 %v368, %v387
    %391 = vrot.lane.b32.xlu0 %v389, 32
    %v392 = vpop.permute.xlu0 %391
    %vm394 = vcmask 256002
    %395 = vst.msk [vmem:[#allocation2] sm:$0x4] %vm394, %v392
    %v396 = vrot.slane %v389, 2
    %397 = vrot.lane.b32.xlu0 %v396, 32
    %v398 = vpop.permute.xlu0 %397
    %v399 = vsel %vm246, %v398, 0
    %401 = vmatpush.msra.mxu0 0.0
    %402 = vmatpush.msra.mxu0 0.0
    %403 = vmatpush.msra.mxu0 0.0
    %404 = vmatpush.msra.mxu0 0.0
    %405 = vmatpush.msra.mxu0 0.0
    %406 = vmatpush.msra.mxu0 0.0
    %407 = vmatpush.msra.mxu0 0.0
    %408 = vmatpush.msra.mxu0 0.0
    %409 = vmatpush.msra.mxu0 0.0
    %410 = vmatpush.msra.mxu0 0.0
    %411 = vmatpush.msra.mxu0 0.0
    %412 = vmatpush.msra.mxu0 0.0
    %413 = vmatpush.msra.mxu0 %v208
    %414 = vmatpush.msra.mxu0 %v207
    %415 = vmatpush.msra.mxu0 %v206
    %416 = vmatpush.msra.mxu0 %v205
    %417 = vmatmul.f32.gmra.mxu0 %v399
    %v418 = vpop.f32.mrf.mxu0
    %v419 = vadd.f32 0.0, %v418
    %420 = vdwg.mxu0
    %v422 = vrot.slane %v419, 5
    %v424 = vadd.f32 %v204, %v422
    %v425 = vxor.u32 %v424, 2147483648
    %v426 = vmul.f32 %v425, 1.442695
    %v427 = vpow.pop %v426
    %v428 = vadd.f32 %v427, 1.0
    %v429 = vrcp.pop %v428
    %v430 = vmul.f32 %v428, %v429
    %v431 = vsub.f32 1.0, %v430
    %v432 = vmul.f32 %v429, %v431
    %v433 = vadd.f32 %v429, %v432
    %vm434 = vweird.f32 %v428
    %vm435 = vweird.f32 %v429
    %vm436 = vmor %vm434, %vm435
    %v437 = vsel %vm436, %v429, %v433
    %v438 = vand.u32 2147483647, %v428
    %vm439 = vcmp.eq.f32.partialorder %v438, 8.507059e+37
    %v440 = vand.u32 %v428, 2147483648
    %v441 = vor.u32 1.1754944e-38, %v440
    %v442 = vsel %vm439, %v441, %v437
    %v443 = vmul.f32 1.0, %v442
    %v444 = vtanh.pop %v424
    %v446 = vrot.slane %v383, 7
    %v448 = vmul.f32 %v443, %v446
    %450 = vrot.lane.b32.xlu0 %v444, 64
    %v451 = vpop.permute.xlu0 %450
    %v453 = vmul.f32 %v443, %v451
    %455 = vrot.lane.b32.xlu0 %v453, 32
    %v456 = vpop.permute.xlu0 %455
    %v458 = vadd.f32 %v448, %v456
    %v459 = vtanh.pop %v458
    %461 = vrot.lane.b32.xlu0 %v459, 64
    %v462 = vpop.permute.xlu0 %461
    %v464 = vmul.f32 %v443, %v462
    %466 = vrot.lane.b32.xlu0 %v464, 32
    %v467 = vpop.permute.xlu0 %466
    %vm469 = vcmask 257027
    %470 = vst.msk [vmem:[#allocation2] sm:$0x8] %vm469, %v467
    %v471 = vrot.slane %v464, 3
    %472 = vrot.lane.b32.xlu0 %v471, 32
    %v473 = vpop.permute.xlu0 %472
    %v474 = vsel %vm246, %v473, 0
    %476 = vmatpush.msra.mxu0 0.0
    %477 = vmatpush.msra.mxu0 0.0
    %478 = vmatpush.msra.mxu0 0.0
    %479 = vmatpush.msra.mxu0 0.0
    %480 = vmatpush.msra.mxu0 0.0
    %481 = vmatpush.msra.mxu0 0.0
    %482 = vmatpush.msra.mxu0 0.0
    %483 = vmatpush.msra.mxu0 0.0
    %484 = vmatpush.msra.mxu0 0.0
    %485 = vmatpush.msra.mxu0 0.0
    %486 = vmatpush.msra.mxu0 0.0
    %487 = vmatpush.msra.mxu0 0.0
    %488 = vmatpush.msra.mxu0 %v208
    %489 = vmatpush.msra.mxu0 %v207
    %490 = vmatpush.msra.mxu0 %v206
    %491 = vmatpush.msra.mxu0 %v205
    %492 = vmatmul.f32.gmra.mxu0 %v474
    %v493 = vpop.f32.mrf.mxu0
    %v494 = vadd.f32 0.0, %v493
    %495 = vdwg.mxu0
    %v497 = vrot.slane %v494, 4
    %v499 = vadd.f32 %v204, %v497
    %v500 = vxor.u32 %v499, 2147483648
    %v501 = vmul.f32 %v500, 1.442695
    %v502 = vpow.pop %v501
    %v503 = vadd.f32 %v502, 1.0
    %v504 = vrcp.pop %v503
    %v505 = vmul.f32 %v503, %v504
    %v506 = vsub.f32 1.0, %v505
    %v507 = vmul.f32 %v504, %v506
    %v508 = vadd.f32 %v504, %v507
    %vm509 = vweird.f32 %v503
    %vm510 = vweird.f32 %v504
    %vm511 = vmor %vm509, %vm510
    %v512 = vsel %vm511, %v504, %v508
    %v513 = vand.u32 2147483647, %v503
    %vm514 = vcmp.eq.f32.partialorder %v513, 8.507059e+37
    %v515 = vand.u32 %v503, 2147483648
    %v516 = vor.u32 1.1754944e-38, %v515
    %v517 = vsel %vm514, %v516, %v512
    %v518 = vmul.f32 1.0, %v517
    %v519 = vtanh.pop %v499
    %v521 = vrot.slane %v458, 7
    %v523 = vmul.f32 %v518, %v521
    %525 = vrot.lane.b32.xlu0 %v519, 64
    %v526 = vpop.permute.xlu0 %525
    %v528 = vmul.f32 %v518, %v526
    %530 = vrot.lane.b32.xlu0 %v528, 32
    %v531 = vpop.permute.xlu0 %530
    %v533 = vadd.f32 %v523, %v531
    %v534 = vtanh.pop %v533
    %536 = vrot.lane.b32.xlu0 %v534, 64
    %v537 = vpop.permute.xlu0 %536
    %v539 = vmul.f32 %v518, %v537
    %541 = vrot.lane.b32.xlu0 %v539, 32
    %v542 = vpop.permute.xlu0 %541
    %vm544 = vcmask 258052
    %545 = vst.msk [vmem:[#allocation2] sm:$0x10] %vm544, %v542
    %v546 = vrot.slane %v539, 4
    %547 = vrot.lane.b32.xlu0 %v546, 32
    %v548 = vpop.permute.xlu0 %547
    %v549 = vsel %vm246, %v548, 0
    %551 = vmatpush.msra.mxu0 0.0
    %552 = vmatpush.msra.mxu0 0.0
    %553 = vmatpush.msra.mxu0 0.0
    %554 = vmatpush.msra.mxu0 0.0
    %555 = vmatpush.msra.mxu0 0.0
    %556 = vmatpush.msra.mxu0 0.0
    %557 = vmatpush.msra.mxu0 0.0
    %558 = vmatpush.msra.mxu0 0.0
    %559 = vmatpush.msra.mxu0 0.0
    %560 = vmatpush.msra.mxu0 0.0
    %561 = vmatpush.msra.mxu0 0.0
    %562 = vmatpush.msra.mxu0 0.0
    %563 = vmatpush.msra.mxu0 %v208
    %564 = vmatpush.msra.mxu0 %v207
    %565 = vmatpush.msra.mxu0 %v206
    %566 = vmatpush.msra.mxu0 %v205
    %567 = vmatmul.f32.gmra.mxu0 %v549
    %v568 = vpop.f32.mrf.mxu0
    %v569 = vadd.f32 0.0, %v568
    %570 = vdwg.mxu0
    %v572 = vrot.slane %v569, 3
    %v574 = vadd.f32 %v204, %v572
    %v575 = vxor.u32 %v574, 2147483648
    %v576 = vmul.f32 %v575, 1.442695
    %v577 = vpow.pop %v576
    %v578 = vadd.f32 %v577, 1.0
    %v579 = vrcp.pop %v578
    %v580 = vmul.f32 %v578, %v579
    %v581 = vsub.f32 1.0, %v580
    %v582 = vmul.f32 %v579, %v581
    %v583 = vadd.f32 %v579, %v582
    %vm584 = vweird.f32 %v578
    %vm585 = vweird.f32 %v579
    %vm586 = vmor %vm584, %vm585
    %v587 = vsel %vm586, %v579, %v583
    %v588 = vand.u32 2147483647, %v578
    %vm589 = vcmp.eq.f32.partialorder %v588, 8.507059e+37
    %v590 = vand.u32 %v578, 2147483648
    %v591 = vor.u32 1.1754944e-38, %v590
    %v592 = vsel %vm589, %v591, %v587
    %v593 = vmul.f32 1.0, %v592
    %v594 = vtanh.pop %v574
    %v596 = vrot.slane %v533, 7
    %v598 = vmul.f32 %v593, %v596
    %600 = vrot.lane.b32.xlu0 %v594, 64
    %v601 = vpop.permute.xlu0 %600
    %v603 = vmul.f32 %v593, %v601
    %605 = vrot.lane.b32.xlu0 %v603, 32
    %v606 = vpop.permute.xlu0 %605
    %v608 = vadd.f32 %v598, %v606
    %v609 = vtanh.pop %v608
    %611 = vrot.lane.b32.xlu0 %v609, 64
    %v612 = vpop.permute.xlu0 %611
    %v614 = vmul.f32 %v593, %v612
    %616 = vrot.lane.b32.xlu0 %v614, 32
    %v617 = vpop.permute.xlu0 %616
    %vm619 = vcmask 259077
    %620 = vst.msk [vmem:[#allocation2] sm:$0x20] %vm619, %v617
    %v621 = vrot.slane %v614, 5
    %622 = vrot.lane.b32.xlu0 %v621, 32
    %v623 = vpop.permute.xlu0 %622
    %v624 = vsel %vm246, %v623, 0
    %626 = vmatpush.msra.mxu0 0.0
    %627 = vmatpush.msra.mxu0 0.0
    %628 = vmatpush.msra.mxu0 0.0
    %629 = vmatpush.msra.mxu0 0.0
    %630 = vmatpush.msra.mxu0 0.0
    %631 = vmatpush.msra.mxu0 0.0
    %632 = vmatpush.msra.mxu0 0.0
    %633 = vmatpush.msra.mxu0 0.0
    %634 = vmatpush.msra.mxu0 0.0
    %635 = vmatpush.msra.mxu0 0.0
    %636 = vmatpush.msra.mxu0 0.0
    %637 = vmatpush.msra.mxu0 0.0
    %638 = vmatpush.msra.mxu0 %v208
    %639 = vmatpush.msra.mxu0 %v207
    %640 = vmatpush.msra.mxu0 %v206
    %641 = vmatpush.msra.mxu0 %v205
    %642 = vmatmul.f32.gmra.mxu0 %v624
    %v643 = vpop.f32.mrf.mxu0
    %v644 = vadd.f32 0.0, %v643
    %645 = vdwg.mxu0
    %v647 = vrot.slane %v644, 2
    %v649 = vadd.f32 %v204, %v647
    %v650 = vxor.u32 %v649, 2147483648
    %v651 = vmul.f32 %v650, 1.442695
    %v652 = vpow.pop %v651
    %v653 = vadd.f32 %v652, 1.0
    %v654 = vrcp.pop %v653
    %v655 = vmul.f32 %v653, %v654
    %v656 = vsub.f32 1.0, %v655
    %v657 = vmul.f32 %v654, %v656
    %v658 = vadd.f32 %v654, %v657
    %vm659 = vweird.f32 %v653
    %vm660 = vweird.f32 %v654
    %vm661 = vmor %vm659, %vm660
    %v662 = vsel %vm661, %v654, %v658
    %v663 = vand.u32 2147483647, %v653
    %vm664 = vcmp.eq.f32.partialorder %v663, 8.507059e+37
    %v665 = vand.u32 %v653, 2147483648
    %v666 = vor.u32 1.1754944e-38, %v665
    %v667 = vsel %vm664, %v666, %v662
    %v668 = vmul.f32 1.0, %v667
    %v669 = vtanh.pop %v649
    %v671 = vrot.slane %v608, 7
    %v673 = vmul.f32 %v668, %v671
    %675 = vrot.lane.b32.xlu0 %v669, 64
    %v676 = vpop.permute.xlu0 %675
    %v678 = vmul.f32 %v668, %v676
    %680 = vrot.lane.b32.xlu0 %v678, 32
    %v681 = vpop.permute.xlu0 %680
    %v683 = vadd.f32 %v673, %v681
    %v684 = vtanh.pop %v683
    %686 = vrot.lane.b32.xlu0 %v684, 64
    %v687 = vpop.permute.xlu0 %686
    %v689 = vmul.f32 %v668, %v687
    %691 = vrot.lane.b32.xlu0 %v689, 32
    %v692 = vpop.permute.xlu0 %691
    %vm694 = vcmask 260102
    %695 = vst.msk [vmem:[#allocation2] sm:$0x40] %vm694, %v692
    %v696 = vrot.slane %v689, 6
    %697 = vrot.lane.b32.xlu0 %v696, 32
    %v698 = vpop.permute.xlu0 %697
    %v699 = vsel %vm246, %v698, 0
    %701 = vmatpush.msra.mxu0 0.0
    %702 = vmatpush.msra.mxu0 0.0
    %703 = vmatpush.msra.mxu0 0.0
    %704 = vmatpush.msra.mxu0 0.0
    %705 = vmatpush.msra.mxu0 0.0
    %706 = vmatpush.msra.mxu0 0.0
    %707 = vmatpush.msra.mxu0 0.0
    %708 = vmatpush.msra.mxu0 0.0
    %709 = vmatpush.msra.mxu0 0.0
    %710 = vmatpush.msra.mxu0 0.0
    %711 = vmatpush.msra.mxu0 0.0
    %712 = vmatpush.msra.mxu0 0.0
    %713 = vmatpush.msra.mxu0 %v208
    %714 = vmatpush.msra.mxu0 %v207
    %715 = vmatpush.msra.mxu0 %v206
    %716 = vmatpush.msra.mxu0 %v205
    %717 = vmatmul.f32.gmra.mxu0 %v699
    %v718 = vpop.f32.mrf.mxu0
    %v719 = vadd.f32 0.0, %v718
    %720 = vdwg.mxu0
    %v722 = vrot.slane %v719, 1
    %v724 = vadd.f32 %v204, %v722
    %v725 = vxor.u32 %v724, 2147483648
    %v726 = vmul.f32 %v725, 1.442695
    %v727 = vpow.pop %v726
    %v728 = vadd.f32 %v727, 1.0
    %v729 = vrcp.pop %v728
    %v730 = vmul.f32 %v728, %v729
    %v731 = vsub.f32 1.0, %v730
    %v732 = vmul.f32 %v729, %v731
    %v733 = vadd.f32 %v729, %v732
    %vm734 = vweird.f32 %v728
    %vm735 = vweird.f32 %v729
    %vm736 = vmor %vm734, %vm735
    %v737 = vsel %vm736, %v729, %v733
    %v738 = vand.u32 2147483647, %v728
    %vm739 = vcmp.eq.f32.partialorder %v738, 8.507059e+37
    %v740 = vand.u32 %v728, 2147483648
    %v741 = vor.u32 1.1754944e-38, %v740
    %v742 = vsel %vm739, %v741, %v737
    %v743 = vmul.f32 1.0, %v742
    %v744 = vtanh.pop %v724
    %v746 = vrot.slane %v683, 7
    %v748 = vmul.f32 %v743, %v746
    %750 = vrot.lane.b32.xlu0 %v744, 64
    %v751 = vpop.permute.xlu0 %750
    %v753 = vmul.f32 %v743, %v751
    %755 = vrot.lane.b32.xlu0 %v753, 32
    %v756 = vpop.permute.xlu0 %755
    %v758 = vadd.f32 %v748, %v756
    %v759 = vtanh.pop %v758
    %761 = vrot.lane.b32.xlu0 %v759, 64
    %v762 = vpop.permute.xlu0 %761
    %v764 = vmul.f32 %v743, %v762
    %766 = vrot.lane.b32.xlu0 %v764, 32
    %v767 = vpop.permute.xlu0 %766
    %vm769 = vcmask 261127
    %770 = vst.msk [vmem:[#allocation2] sm:$0x80] %vm769, %v767
    %v771 = vld [vmem:[#allocation2] sm:$0xff]
    %v772 = vld [vmem:[%s2 + $0x140] sm:$0xff]
    %v773 = vld [vmem:[%s2 + $0x148] sm:$0xff]
    %v774 = vld [vmem:[%s2 + $0x150] sm:$0xff]
    %v775 = vld [vmem:[%s2 + $0x158] sm:$0xff]
    %v776 = vld [vmem:[%s3 + $0x3] sm:$0x1]
    %v777 = vperm.slane %v776, 0
    %v779 = vsel %vm246, %v771, 0
    %781 = vmatpush.msra.mxu0 0.0
    %782 = vmatpush.msra.mxu0 0.0
    %783 = vmatpush.msra.mxu0 0.0
    %784 = vmatpush.msra.mxu0 0.0
    %785 = vmatpush.msra.mxu0 0.0
    %786 = vmatpush.msra.mxu0 0.0
    %787 = vmatpush.msra.mxu0 0.0
    %788 = vmatpush.msra.mxu0 0.0
    %789 = vmatpush.msra.mxu0 0.0
    %790 = vmatpush.msra.mxu0 0.0
    %791 = vmatpush.msra.mxu0 0.0
    %792 = vmatpush.msra.mxu0 0.0
    %793 = vmatpush.msra.mxu0 %v775
    %794 = vmatpush.msra.mxu0 %v774
    %795 = vmatpush.msra.mxu0 %v773
    %796 = vmatpush.msra.mxu0 %v772
    %797 = vmatmul.f32.gmra.mxu0 %v779
    %v798 = vpop.f32.mrf.mxu0
    %v799 = vadd.f32 %v777, %v798
    %800 = vdwg.mxu0
    %801 = vst.msk [vmem:[#allocation3] sm:$0xff] %vm158, %v799
    // Predicated region
    $region18: #{qrcnn_forward_pallas.1} parent=1 // pred_check
      _
    $region19: #{qrcnn_forward_pallas.1} parent=1 // pred_check_branch
      %803 = sbr.rel (0) target = $region21
    $region20: #{qrcnn_forward_pallas.1} parent=1 // pred_region
      %805 = vsyncadd [#allocation4], 0
      %s807 = sshll.u32 [#allocation3], 4
      %s808 = int_to_ptr.vmem [resolvable:$true] %s807
      %s809 = sshll.u32 %s4, 4
      %s810 = int_to_ptr.hbm [resolvable:$true] %s809
      %812 = dma.vmem_to_hbm [thread:$0]  %s808, 128, %s810, [#allocation4]
    $region21: #{qrcnn_forward_pallas.1} parent=1 // pred_fallthru
      _
    // Predicated region
    $region22: #{qrcnn_forward_pallas.1} parent=1 // pred_check
      _
    $region23: #{qrcnn_forward_pallas.1} parent=1 // pred_check_branch
      %814 = sbr.rel (0) target = $region25
    $region24: #{qrcnn_forward_pallas.1} parent=1 // pred_region
      %816 = dma.done [#allocation4], 128
    $region25: #{qrcnn_forward_pallas.1} parent=1 // pred_fallthru
      _
    %817 = vsyncpa [#allocation4], 1

</llo_original>
